<compile_context>
chip_gen: v5e
topology: v5e:2x2
jax: 0.10.0
libtpu: 0.0.40
codegen_flags: <defaults>
</compile_context>

<pallas_src>
import functools

import jax
import jax.numpy as jnp
from jax import lax
from jax.experimental import pallas as pl
from jax.experimental.pallas import tpu as pltpu

_LANE = 128
_MAX_BLOCK_ROWS = 4096          # (4096,128) f32 = 2 MiB / input block
_VMEM_LIMIT = 32 * 1024 * 1024  # safe on v5e/v6e (128 MiB phys) and v7x (64 MiB phys)


def _round_up(x: int, m: int) -> int:
    return pl.cdiv(x, m) * m


def _rmsle_partial_kernel(pred_ref, actual_ref, out_ref, *,
                          use_mae: bool, block_rows: int,
                          valid_rows: int, need_mask: bool):
    """Per grid step: write one (8, 128) lane-dense partial-sum tile.

    partial = sum over this block of (log(pred+1) - log(actual+1))^2  (or |.|),
    folded down the sublane-group axis (pure VPU adds).  Final reduce + mean
    happen in the wrapper, so the grid axis stays fully parallel.
    """
    p = pred_ref[...].astype(jnp.float32)
    a = actual_ref[...].astype(jnp.float32)
    d = jnp.log(p + 1.0) - jnp.log(a + 1.0)
    contrib = jnp.abs(d) if use_mae else d * d

    if need_mask:
        # Last block may overhang the array; padded rows are undefined -> select 0
        # (select, not multiply, so NaN/Inf in padded lanes cannot propagate).
        i = pl.program_id(0)
        row_ids = i * block_rows + lax.broadcasted_iota(
            jnp.int32, (block_rows, _LANE), 0)
        contrib = jnp.where(row_ids < valid_rows, contrib, 0.0)

    # (block_rows,128) -> (block_rows//8, 8, 128): layout-preserving reshape,
    # then a VPU-only reduction across native (8,128) tiles.
    partial = contrib.reshape(block_rows // 8, 8, _LANE).sum(axis=0)
    out_ref[...] = partial[None, :, :]


def rmsle_loss(pred: jax.Array, actual: jax.Array, loss: str = "MSE") -> jax.Array:
    """Pallas implementation of RMSLELoss.forward (mean reduction)."""
    assert pred.shape == actual.shape, "pred/actual must have the same shape"
    use_mae = (loss == "MAE")
    n = pred.size

    # Keep f32/bf16 in their native dtype (narrow DMA, upcast in-kernel);
    # anything else is cast to f32 once in the wrapper.
    if pred.dtype == actual.dtype and pred.dtype in (jnp.float32, jnp.bfloat16):
        in_dtype = pred.dtype
        flat_p = pred.reshape(-1)
        flat_a = actual.reshape(-1)
    else:
        in_dtype = jnp.float32
        flat_p = pred.reshape(-1).astype(jnp.float32)
        flat_a = actual.reshape(-1).astype(jnp.float32)

    n_main = (n // _LANE) * _LANE
    rows = n_main // _LANE

    total = jnp.zeros((), jnp.float32)

    if rows > 0:
        p2 = flat_p[:n_main].reshape(rows, _LANE)
        a2 = flat_a[:n_main].reshape(rows, _LANE)

        # Sublane packing granularity: 8 for 4-byte dtypes, 16 for bf16.
        sub = 16 if in_dtype == jnp.bfloat16 else 8
        block_rows = min(_MAX_BLOCK_ROWS, _round_up(rows, sub))
        num_blocks = pl.cdiv(rows, block_rows)
        need_mask = (num_blocks * block_rows != rows)

        kernel = functools.partial(
            _rmsle_partial_kernel,
            use_mae=use_mae,
            block_rows=block_rows,
            valid_rows=rows,
            need_mask=need_mask,
        )

        partials = pl.pallas_call(
            kernel,
            out_shape=jax.ShapeDtypeStruct((num_blocks, 8, _LANE), jnp.float32),
            grid_spec=pltpu.PrefetchScalarGridSpec(
                num_scalar_prefetch=0,
                grid=(num_blocks,),
                in_specs=[
                    pl.BlockSpec((block_rows, _LANE), lambda i: (i, 0)),
                    pl.BlockSpec((block_rows, _LANE), lambda i: (i, 0)),
                ],
                out_specs=pl.BlockSpec((1, 8, _LANE), lambda i: (i, 0, 0)),
            ),
            compiler_params=pltpu.CompilerParams(
                # Per-block partial sums -> no resident accumulator, so the grid
                # axis can be split across TensorCores (v7x megacore).
                dimension_semantics=("parallel",),
                vmem_limit_bytes=_VMEM_LIMIT,
            ),
        )(p2, a2)
        total = total + jnp.sum(partials, dtype=jnp.float32)

    tail = n - n_main
    if tail:
        # <128 leftover elements (can't form a lane-dense row): plain jnp, tiny.
        tp = flat_p[n_main:].astype(jnp.float32)
        ta = flat_a[n_main:].astype(jnp.float32)
        dt = jnp.log(tp + 1.0) - jnp.log(ta + 1.0)
        total = total + (jnp.sum(jnp.abs(dt)) if use_mae else jnp.sum(dt * dt))

    # mean reduction (divide by the original element count)
    return (total / jnp.float32(n)).astype(jnp.float32)


if __name__ == "__main__":
    key = jax.random.PRNGKey(0)
    k1, k2, k3, k4 = jax.random.split(key, 4)

    # Small shape consistent with a regression-style loss: (batch=2, ch=4, 16, 16).
    shape = (2, 4, 16, 16)
    # log(pred + 1) requires pred + 1 > 0; use non-negative inputs as RMSLE expects.
    pred = jax.random.uniform(k1, shape, dtype=jnp.float32, minval=0.0, maxval=5.0)
    actual = jax.random.uniform(k2, shape, dtype=jnp.float32, minval=0.0, maxval=5.0)

    out = jax.block_until_ready(rmsle_loss(pred, actual, loss="MSE"))
    ref = jnp.mean((jnp.log(pred + 1.0) - jnp.log(actual + 1.0)) ** 2)
    assert jnp.allclose(out, ref, rtol=1e-5, atol=1e-6), (out, ref)

    # MAE variant of the module.
    out_mae = jax.block_until_ready(rmsle_loss(pred, actual, loss="MAE"))
    ref_mae = jnp.mean(jnp.abs(jnp.log(pred + 1.0) - jnp.log(actual + 1.0)))
    assert jnp.allclose(out_mae, ref_mae, rtol=1e-5, atol=1e-6), (out_mae, ref_mae)

    # Medium shape exercising the multi-block grid, the masked partial last
    # block, and the <128-element lane tail (750000 = 5859*128 + 48 elements).
    shape2 = (2, 5, 300, 250)
    pred2 = jax.random.uniform(k3, shape2, dtype=jnp.float32, minval=0.0, maxval=5.0)
    actual2 = jax.random.uniform(k4, shape2, dtype=jnp.float32, minval=0.0, maxval=5.0)
    out2 = jax.block_until_ready(rmsle_loss(pred2, actual2, loss="MSE"))
    ref2 = jnp.mean((jnp.log(pred2 + 1.0) - jnp.log(actual2 + 1.0)) ** 2)
    assert jnp.allclose(out2, ref2, rtol=5e-4, atol=1e-6), (out2, ref2)

    print("KERNEL_OK")
</pallas_src>

<mosaic_0001>
module attributes {stable_mosaic.version = 11 : i64} {
  func.func @_rmsle_partial_kernel(%arg0: i32, %arg1: memref<16x128xf32, #tpu.memory_space<vmem>>, %arg2: memref<16x128xf32, #tpu.memory_space<vmem>>, %arg3: memref<1x8x128xf32, #tpu.memory_space<vmem>>) attributes {dimension_semantics = [#tpu.dimension_semantics<parallel>], iteration_bounds = array<i64: 1>, scalar_prefetch = 0 : i64, scratch_operands = 0 : i64, tpu.core_type = #tpu.core_type<tc>, window_params = [{transform_indices = @transform_0, window_bounds = array<i64: 16, 128>}, {transform_indices = @transform_1, window_bounds = array<i64: 16, 128>}, {transform_indices = @transform_2, window_bounds = array<i64: 1, 8, 128>}]} {
    %c0 = arith.constant 0 : index
    %c0_0 = arith.constant 0 : index
    %0 = vector.load %arg1[%c0, %c0_0] : memref<16x128xf32, #tpu.memory_space<vmem>>, vector<16x128xf32>
    %c0_1 = arith.constant 0 : index
    %c0_2 = arith.constant 0 : index
    %1 = vector.load %arg2[%c0_1, %c0_2] : memref<16x128xf32, #tpu.memory_space<vmem>>, vector<16x128xf32>
    %cst = arith.constant 1.000000e+00 : f32
    %2 = vector.broadcast %cst : f32 to vector<16x128xf32>
    %3 = arith.addf %0, %2 : vector<16x128xf32>
    %4 = math.log %3 : vector<16x128xf32>
    %cst_3 = arith.constant 1.000000e+00 : f32
    %5 = vector.broadcast %cst_3 : f32 to vector<16x128xf32>
    %6 = arith.addf %1, %5 : vector<16x128xf32>
    %7 = math.log %6 : vector<16x128xf32>
    %8 = arith.subf %4, %7 : vector<16x128xf32>
    %9 = arith.mulf %8, %8 : vector<16x128xf32>
    %10 = vector.shape_cast %9 : vector<16x128xf32> to vector<2x8x128xf32>
    %cst_4 = arith.constant dense<0.000000e+00> : vector<8x128xf32>
    %11 = vector.multi_reduction <add>, %10, %cst_4 [0] : vector<2x8x128xf32> to vector<8x128xf32>
    %12 = vector.shape_cast %11 : vector<8x128xf32> to vector<1x8x128xf32>
    %c0_5 = arith.constant 0 : index
    %c0_6 = arith.constant 0 : index
    %c0_7 = arith.constant 0 : index
    %13 = vector.load %arg3[%c0_5, %c0_6, %c0_7] : memref<1x8x128xf32, #tpu.memory_space<vmem>>, vector<1x8x128xf32>
    tpu.vector_store %arg3[%c0_5, %c0_6, %c0_7], %12 {strides = array<i32>} : memref<1x8x128xf32, #tpu.memory_space<vmem>>, vector<1x8x128xf32>,
    return
  }
  func.func @transform_0(%arg0: i32) -> (i32, i32) {
    %c0_i32 = arith.constant 0 : i32
    %c0_i32_0 = arith.constant 0 : i32
    return %arg0, %c0_i32 : i32, i32
  }
  func.func @transform_1(%arg0: i32) -> (i32, i32) {
    %c0_i32 = arith.constant 0 : i32
    %c0_i32_0 = arith.constant 0 : i32
    return %arg0, %c0_i32 : i32, i32
  }
  func.func @transform_2(%arg0: i32) -> (i32, i32, i32) {
    %c0_i32 = arith.constant 0 : i32
    %c0_i32_0 = arith.constant 0 : i32
    %c0_i32_1 = arith.constant 0 : i32
    return %arg0, %c0_i32, %c0_i32_0 : i32, i32, i32
  }
}

</mosaic_0001>

<llo_original>
// kernel: tpu_custom_call.1
$region0: #{tpu_custom_call.1}
  #allocation0 [shape = 'u32[]', space=smem, size = 0x4, offset = 0x4, fixed_abs, tag = 'smem constant byte address 0x4 - core index']
  #allocation1 [shape = 'u32[72,128]{1,0:T(1,128)}', space=vmem, size = 0x9000, scoped, tag = 'internal scratch']
  %s0 = inlined_call_operand.hbm [shape: f32[16,128], index: 0, kind: input, shape index: {}]
  %s1 = inlined_call_operand.hbm [shape: f32[16,128], index: 1, kind: input, shape index: {}]
  %s2 = inlined_call_operand.hbm [shape: f32[1,8,128], index: 2, kind: output, shape index: {}]
  %s3 = sld [smem:[#allocation0]]
  $region26: #{tpu_custom_call.1} parent=0
    _
  %s5 = ssub.s32 1, %s3
  %s6 = scalar_select 0, %s5, %s3
  $region1: #{tpu_custom_call.1} parent=0
    #allocation2 [shape = 'u8[8192]{0}', space=vmem, size = 0x2000, scoped, tag = 'input window, operand 0, single buffered']
    #allocation3 [shape = 's32[1]{0}', space=sflag, size = 0x4, scoped, tag = 'scoped memory for tpu_custom_call.1']
    #allocation4 [shape = 's32[1]{0}', space=sflag, size = 0x4, scoped, tag = 'scoped memory for tpu_custom_call.1']
    #allocation5 [shape = 'u8[8192]{0}', space=vmem, size = 0x2000, scoped, tag = 'input window, operand 1, single buffered']
    #allocation6 [shape = 's32[1]{0}', space=sflag, size = 0x4, scoped, tag = 'scoped memory for tpu_custom_call.1']
    #allocation7 [shape = 'u8[4096]{0}', space=vmem, size = 0x1000, scoped, tag = 'output window, operand 0, single buffered']
    %7 = vsyncpa [#allocation3], 0
    %8 = vsyncpa [#allocation6], 0
    %9 = vsyncpa [#allocation4], 0
    // Predicated region
    $region2: #{tpu_custom_call.1} parent=1 // pred_check
      _
    $region3: #{tpu_custom_call.1} parent=1 // pred_check_branch
      %11 = sbr.rel (0) target = $region5
    $region4: #{tpu_custom_call.1} parent=1 // pred_region
      %13 = vsyncadd [#allocation3], 0
      %s14 = sshll.u32 %s0, 4
      %s15 = int_to_ptr.hbm [resolvable:$true] %s14
      %s16 = sshll.u32 [#allocation2], 4
      %s17 = int_to_ptr.vmem [resolvable:$true] %s16
      %22 = dma.hbm_to_vmem [thread:$0]  %s15, 256, %s17, [#allocation3], 128, 128, 8
    $region5: #{tpu_custom_call.1} parent=1 // pred_fallthru
      _
    // Predicated region
    $region6: #{tpu_custom_call.1} parent=1 // pred_check
      _
    $region7: #{tpu_custom_call.1} parent=1 // pred_check_branch
      %24 = sbr.rel (0) target = $region9
    $region8: #{tpu_custom_call.1} parent=1 // pred_region
      %26 = vsyncadd [#allocation6], 0
      %s27 = sshll.u32 %s1, 4
      %s28 = int_to_ptr.hbm [resolvable:$true] %s27
      %s29 = sshll.u32 [#allocation5], 4
      %s30 = int_to_ptr.vmem [resolvable:$true] %s29
      %35 = dma.hbm_to_vmem [thread:$0]  %s28, 256, %s30, [#allocation6], 128, 128, 8
    $region9: #{tpu_custom_call.1} parent=1 // pred_fallthru
      _
    // Predicated region
    $region10: #{tpu_custom_call.1} parent=1 // pred_check
      _
    $region11: #{tpu_custom_call.1} parent=1 // pred_check_branch
      %37 = sbr.rel (0) target = $region13
    $region12: #{tpu_custom_call.1} parent=1 // pred_region
      %39 = dma.done [#allocation3], 256
    $region13: #{tpu_custom_call.1} parent=1 // pred_fallthru
      _
    // Predicated region
    $region14: #{tpu_custom_call.1} parent=1 // pred_check
      _
    $region15: #{tpu_custom_call.1} parent=1 // pred_check_branch
      %41 = sbr.rel (0) target = $region17
    $region16: #{tpu_custom_call.1} parent=1 // pred_region
      %43 = dma.done [#allocation6], 256
    $region17: #{tpu_custom_call.1} parent=1 // pred_fallthru
      _
    %v44 = vld [vmem:[#allocation2] sm:$0xff]
    %v45 = vld [vmem:[#allocation2 + $0x8] sm:$0xff]
    %v46 = vld [vmem:[#allocation5] sm:$0xff]
    %v47 = vld [vmem:[#allocation5 + $0x8] sm:$0xff]
    %v48 = vadd.f32 %v44, 1.0
    %v49 = vadd.f32 %v45, 1.0
    %v50 = vlog2.pop %v48
    %v51 = vmul.f32 %v50, 0.6931472
    %v52 = vlog2.pop %v49
    %v53 = vmul.f32 %v52, 0.6931472
    %v54 = vadd.f32 %v46, 1.0
    %v55 = vadd.f32 %v47, 1.0
    %v56 = vlog2.pop %v54
    %v57 = vmul.f32 %v56, 0.6931472
    %v58 = vlog2.pop %v55
    %v59 = vmul.f32 %v58, 0.6931472
    %v60 = vsub.f32 %v51, %v57
    %v61 = vsub.f32 %v53, %v59
    %v62 = vmul.f32 %v60, %v60
    %v63 = vmul.f32 %v61, %v61
    %v64 = vadd.f32 %v62, %v63
    %65 = vst [vmem:[#allocation7] sm:$0xff] %v64
    // Predicated region
    $region18: #{tpu_custom_call.1} parent=1 // pred_check
      _
    $region19: #{tpu_custom_call.1} parent=1 // pred_check_branch
      %67 = sbr.rel (0) target = $region21
    $region20: #{tpu_custom_call.1} parent=1 // pred_region
      %69 = vsyncadd [#allocation4], 0
      %s71 = sshll.u32 [#allocation7], 4
      %s72 = int_to_ptr.vmem [resolvable:$true] %s71
      %s73 = sshll.u32 %s2, 4
      %s74 = int_to_ptr.hbm [resolvable:$true] %s73
      %76 = dma.vmem_to_hbm [thread:$0]  %s72, 128, %s74, [#allocation4]
    $region21: #{tpu_custom_call.1} parent=1 // pred_fallthru
      _
    // Predicated region
    $region22: #{tpu_custom_call.1} parent=1 // pred_check
      _
    $region23: #{tpu_custom_call.1} parent=1 // pred_check_branch
      %78 = sbr.rel (0) target = $region25
    $region24: #{tpu_custom_call.1} parent=1 // pred_region
      %80 = dma.done [#allocation4], 128
    $region25: #{tpu_custom_call.1} parent=1 // pred_fallthru
      _
    %81 = vsyncpa [#allocation3], 1
    %82 = vsyncpa [#allocation6], 1
    %83 = vsyncpa [#allocation4], 1

</llo_original>
